<compile_context>
chip_gen: v7x
topology: tpu7x:2x2x1
jax: 0.10.0
libtpu: 0.0.40
codegen_flags: <defaults>
</compile_context>

<pallas_src>
from typing import Any, NamedTuple, Optional

import jax
import jax.numpy as jnp
from jax.experimental import pallas as pl
from jax.experimental.pallas import tpu as pltpu


def _round_up(x: int, m: int) -> int:
    return (x + m - 1) // m * m


def _vmem_budget_bytes() -> int:
    """Per-generation VMEM budget for tile sizing / compiler limit."""
    try:
        cap = int(pltpu.get_tpu_info().vmem_capacity_bytes)
    except Exception:
        cap = 64 << 20                      # conservative (v7x-sized)
    if cap >= (128 << 20):                  # v5e / v6e: 128 MiB physical
        return 100 << 20
    # v7x (64 MiB physical): leave headroom for compiler-internal scratch.
    return min(48 << 20, (cap * 3) // 4)


def _pick_tile(full128: int, fits) -> Optional[int]:
    """Largest 128-multiple tile <= full128 that fits; prefer minimal padding."""
    best = None                              # ((pad_waste, -tile), tile)
    for t in range(128, full128 + 1, 128):
        if not fits(t):
            continue
        waste = _round_up(full128, t) - full128
        key = (waste, -t)
        if best is None or key < best[0]:
            best = (key, t)
    return None if best is None else best[1]


def _choose_tiles(k: int, n: int, itemc: int, tm_hint: int, budget: int):
    """Pick (tk, tn) targeting full-K / full-N residency within `budget`."""
    k128, n128 = _round_up(k, 128), _round_up(n, 128)

    def need(tk, tn):
        # Double-buffered x / W / out tiles + bias (+ f32 acc if K is tiled).
        # x and out sized at 4 B/elem (covers f32 x fed for in-kernel cast).
        acc = 0 if tk >= k128 else tm_hint * tn * 4
        return (2 * tm_hint * tk * 4 + 2 * tk * tn * itemc
                + 2 * tm_hint * tn * 4 + 2 * tn * 4 + acc)

    # 1) Fully resident K and N: single matmul per row tile, no K axis.
    if need(k128, n128) <= budget:
        return k128, n128
    # 2) Full K, tile N (weight stays K-resident, x read n_pad/tn times).
    tn = _pick_tile(n128, lambda t: need(k128, t) <= budget)
    if tn is not None:
        return k128, tn
    # 3) Tile K too (very large K): modest N tile, biggest fitting K tile.
    tn = min(256, n128)
    tk = _pick_tile(k128, lambda t: need(t, tn) <= budget)
    return (tk if tk is not None else 128), tn


def _choose_tm(b_rows: int, sub: int, tm_max: int) -> int:
    """Row tile minimizing ragged-batch padding (ties -> larger tile)."""
    if b_rows <= 128:
        return _round_up(b_rows, sub)
    best_t, best_waste = None, None
    t = 128
    while t <= tm_max:
        waste = _round_up(b_rows, t) - b_rows
        if best_waste is None or waste < best_waste or (
                waste == best_waste and t > best_t):
            best_t, best_waste = t, waste
        t += 128
    return best_t if best_t is not None else 128


# ----------------------------- kernels ------------------------------------ #

def _linear_relu_kernel(x_ref, w_ref, b_ref, o_ref):
    # Full-K path: one MXU matmul per (M, N) tile, no accumulator scratch.
    x = x_ref[...].astype(w_ref.dtype)                 # no-op if already bf16
    y = jnp.dot(x, w_ref[...], preferred_element_type=jnp.float32) + b_ref[...]
    o_ref[...] = jnp.maximum(y, 0.0).astype(o_ref.dtype)


def _linear_relu_acc_kernel(x_ref, w_ref, b_ref, o_ref, acc_ref):
    # Tiled-K fallback: resident f32 accumulator, bias folded into init.
    k = pl.program_id(2)

    @pl.when(k == 0)
    def _init():
        acc_ref[...] = jnp.broadcast_to(b_ref[...], acc_ref.shape)

    acc_ref[...] += jnp.dot(x_ref[...].astype(w_ref.dtype), w_ref[...],
                            preferred_element_type=jnp.float32)

    @pl.when(k == pl.num_programs(2) - 1)
    def _finalize():
        o_ref[...] = jnp.maximum(acc_ref[...], 0.0).astype(o_ref.dtype)


# ----------------------------- wrapper ------------------------------------ #

class LinearParams(NamedTuple):
    w_kn: jax.Array       # (K_pad, N_pad), compute dtype, zero-padded
    b_2d: jax.Array       # (1, N_pad), float32, zero-padded
    n: int                # original out_features
    k: int                # original in_features
    tn: int               # N tile (multiple of 128)
    tk: int               # K tile (multiple of 128; == K_pad when K resident)
    tm_hint: int          # max row tile used for sizing
    compute_dtype: Any    # dtype fed to the MXU


def prepare_linear_params(weight, bias, *, compute_dtype=jnp.bfloat16,
                          tm_hint: int = 256,
                          vmem_budget_bytes: Optional[int] = None
                          ) -> LinearParams:
    """One-time conversion of PyTorch nn.Linear parameters.

    weight: (out_features, in_features), bias: (out_features,).
    Transposes to (K, N), casts to `compute_dtype`, zero-pads to tile
    multiples; tile sizes target full K/N residency within the VMEM budget.
    """
    n, k = weight.shape
    budget = _vmem_budget_bytes() if vmem_budget_bytes is None \
        else int(vmem_budget_bytes)
    itemc = jnp.dtype(compute_dtype).itemsize
    tk, tn = _choose_tiles(k, n, itemc, tm_hint, budget)

    k_pad = _round_up(k, tk)
    n_pad = _round_up(n, tn)
    w_kn = weight.T.astype(compute_dtype)                       # (K, N)
    w_kn = jnp.pad(w_kn, ((0, k_pad - k), (0, n_pad - n)))
    b_2d = jnp.pad(bias.astype(jnp.float32), (0, n_pad - n)).reshape(1, n_pad)
    return LinearParams(w_kn, b_2d, n, k, tn, tk, tm_hint, compute_dtype)


def linear_block(x, params: LinearParams):
    """Pallas equivalent of LinearBlock.forward: relu(x @ W^T + b)."""
    b_rows, k = x.shape
    assert k == params.k, "in_features mismatch"
    cdt = params.compute_dtype
    out_dtype = x.dtype
    k_pad, n_pad = params.w_kn.shape
    tn_call, tk = params.tn, params.tk

    sub = 16 if jnp.dtype(cdt).itemsize == 2 else 8
    tm_eff = _choose_tm(b_rows, sub, params.tm_hint)
    b_pad = _round_up(b_rows, tm_eff)

    # v7x megacore: guarantee >=2 parallel blocks when the problem is tiny.
    if (b_pad // tm_eff) * (n_pad // tn_call) == 1:
        if tm_eff >= 2 * sub and (tm_eff // 2) % sub == 0:
            tm_eff //= 2
        elif tn_call >= 256 and (tn_call // 2) % 128 == 0:
            tn_call //= 2

    grid_m = b_pad // tm_eff
    grid_n = n_pad // tn_call
    grid_k = k_pad // tk

    # x hot path: skip the wrapper cast+pad pass when x is already tile-aligned
    # and re-read <=3x across N; the bf16 cast then happens inside the kernel.
    need_pad = (b_pad != b_rows) or (k_pad != k)
    if need_pad:
        x_in = jnp.pad(x.astype(cdt), ((0, b_pad - b_rows), (0, k_pad - k)))
    elif grid_n > 3 and x.dtype != cdt:
        x_in = x.astype(cdt)
    else:
        x_in = x

    vmem_limit = _vmem_budget_bytes()
    out_shape = jax.ShapeDtypeStruct((b_pad, n_pad), out_dtype)

    if grid_k == 1:
        # Full-K path: 2-D all-parallel grid, no scratch, no pl.when.
        out_padded = pl.pallas_call(
            _linear_relu_kernel,
            out_shape=out_shape,
            grid_spec=pltpu.PrefetchScalarGridSpec(
                num_scalar_prefetch=0,
                grid=(grid_m, grid_n),
                in_specs=[
                    pl.BlockSpec((tm_eff, tk), lambda i, j: (i, 0)),     # x
                    pl.BlockSpec((tk, tn_call), lambda i, j: (0, j)),    # W
                    pl.BlockSpec((1, tn_call), lambda i, j: (0, j)),     # bias
                ],
                out_specs=pl.BlockSpec((tm_eff, tn_call), lambda i, j: (i, j)),
            ),
            compiler_params=pltpu.CompilerParams(
                dimension_semantics=("parallel", "parallel"),
                vmem_limit_bytes=vmem_limit,
            ),
        )(x_in, params.w_kn, params.b_2d)
    else:
        # Tiled-K fallback: resident f32 accumulator across the K axis.
        out_padded = pl.pallas_call(
            _linear_relu_acc_kernel,
            out_shape=out_shape,
            grid_spec=pltpu.PrefetchScalarGridSpec(
                num_scalar_prefetch=0,
                grid=(grid_m, grid_n, grid_k),
                in_specs=[
                    pl.BlockSpec((tm_eff, tk), lambda i, j, kk: (i, kk)),
                    pl.BlockSpec((tk, tn_call), lambda i, j, kk: (kk, j)),
                    pl.BlockSpec((1, tn_call), lambda i, j, kk: (0, j)),
                ],
                out_specs=pl.BlockSpec((tm_eff, tn_call),
                                       lambda i, j, kk: (i, j)),
                scratch_shapes=[pltpu.VMEM((tm_eff, tn_call), jnp.float32)],
            ),
            compiler_params=pltpu.CompilerParams(
                dimension_semantics=("parallel", "parallel", "arbitrary"),
                vmem_limit_bytes=vmem_limit,
            ),
        )(x_in, params.w_kn, params.b_2d)

    return out_padded[:b_rows, :params.n]


# TODO(synk): optional v7x-only fp8 weight storage (bf16 x fp8 MXU) not enabled;
# kept bf16 weights for uniform numerics across v5e/v6e/v7x.

if __name__ == "__main__":
    key = jax.random.PRNGKey(0)
    keys = jax.random.split(key, 9)

    # ---- Case 1: module-like small shapes (batch=8, 32 -> 64) -------------
    batch, in_ch, out_ch = 8, 32, 64
    x = jax.random.normal(keys[0], (batch, in_ch), dtype=jnp.float32)
    weight = jax.random.normal(keys[1], (out_ch, in_ch), dtype=jnp.float32) * 0.1
    bias = jax.random.normal(keys[2], (out_ch,), dtype=jnp.float32) * 0.1

    params = prepare_linear_params(weight, bias)     # one-time, off hot path
    out = jax.block_until_ready(linear_block(x, params))
    assert out.shape == (batch, out_ch)
    ref_bf16 = jnp.maximum(
        jnp.dot(x.astype(jnp.bfloat16), weight.T.astype(jnp.bfloat16),
                preferred_element_type=jnp.float32) + bias, 0.0)
    assert jnp.allclose(out, ref_bf16, atol=2e-3, rtol=2e-3)
    ref_f32 = jnp.maximum(x @ weight.T + bias, 0.0)
    assert jnp.allclose(out, ref_f32, atol=3e-2, rtol=3e-2)

    # ---- Case 2: ragged batch + larger K/N (full-residency path) ----------
    b2, in2, out2 = 300, 640, 384
    x2 = jax.random.normal(keys[3], (b2, in2), dtype=jnp.float32)
    w2 = jax.random.normal(keys[4], (out2, in2), dtype=jnp.float32) * 0.05
    bz2 = jax.random.normal(keys[5], (out2,), dtype=jnp.float32) * 0.05
    params2 = prepare_linear_params(w2, bz2)
    assert params2.tk == params2.w_kn.shape[0]       # K fully resident
    out2_v = jax.block_until_ready(linear_block(x2, params2))
    assert out2_v.shape == (b2, out2)
    ref2 = jnp.maximum(
        jnp.dot(x2.astype(jnp.bfloat16), w2.T.astype(jnp.bfloat16),
                preferred_element_type=jnp.float32) + bz2, 0.0)
    assert jnp.allclose(out2_v, ref2, atol=2e-3, rtol=2e-3)

    # ---- Case 3: force the tiled-K fallback (tiny artificial budget) ------
    params3 = prepare_linear_params(w2, bz2, vmem_budget_bytes=1_300_000)
    assert params3.tk < params3.w_kn.shape[0]        # K really is tiled
    out3_v = jax.block_until_ready(linear_block(x2, params3))
    assert out3_v.shape == (b2, out2)
    assert jnp.allclose(out3_v, ref2, atol=2e-3, rtol=2e-3)

    # ---- Case 4: fully aligned input -> no wrapper cast/pad, in-kernel cast,
    #              and the single-tile grid split for v7x's second core ------
    b4, in4, out4 = 256, 512, 256
    x4 = jax.random.normal(keys[6], (b4, in4), dtype=jnp.float32)
    w4 = jax.random.normal(keys[7], (out4, in4), dtype=jnp.float32) * 0.05
    bz4 = jax.random.normal(keys[8], (out4,), dtype=jnp.float32) * 0.05
    params4 = prepare_linear_params(w4, bz4)
    out4_v = jax.block_until_ready(linear_block(x4, params4))
    assert out4_v.shape == (b4, out4)
    ref4 = jnp.maximum(
        jnp.dot(x4.astype(jnp.bfloat16), w4.T.astype(jnp.bfloat16),
                preferred_element_type=jnp.float32) + bz4, 0.0)
    assert jnp.allclose(out4_v, ref4, atol=2e-3, rtol=2e-3)

    print("KERNEL_OK")
</pallas_src>

<mosaic_0001>
module attributes {stable_mosaic.version = 11 : i64} {
  func.func @_linear_relu_kernel(%arg0: i32, %arg1: i32, %arg2: memref<16x128xbf16, #tpu.memory_space<vmem>>, %arg3: memref<128x128xbf16, #tpu.memory_space<vmem>>, %arg4: memref<1x128xf32, #tpu.memory_space<vmem>>, %arg5: memref<16x128xf32, #tpu.memory_space<vmem>>) attributes {dimension_semantics = [#tpu.dimension_semantics<parallel>, #tpu.dimension_semantics<parallel>], iteration_bounds = array<i64: 1, 1>, scalar_prefetch = 0 : i64, scratch_operands = 0 : i64, tpu.core_type = #tpu.core_type<tc>, window_params = [{transform_indices = @transform_0, window_bounds = array<i64: 16, 128>}, {transform_indices = @transform_1, window_bounds = array<i64: 128, 128>}, {transform_indices = @transform_2, window_bounds = array<i64: 1, 128>}, {transform_indices = @transform_3, window_bounds = array<i64: 16, 128>}]} {
    %c0 = arith.constant 0 : index
    %c0_0 = arith.constant 0 : index
    %0 = vector.load %arg2[%c0, %c0_0] : memref<16x128xbf16, #tpu.memory_space<vmem>>, vector<16x128xbf16>
    %c0_1 = arith.constant 0 : index
    %c0_2 = arith.constant 0 : index
    %1 = vector.load %arg3[%c0_1, %c0_2] : memref<128x128xbf16, #tpu.memory_space<vmem>>, vector<128x128xbf16>
    %cst = arith.constant dense<0.000000e+00> : vector<16x128xf32>
    %2 = tpu.matmul %0, %1, %cst {dimension_numbers = #tpu.dot_dimension_numbers<[1], [0], [0], [1], [0, 0, 1, 1], [], []>} : vector<16x128xbf16>, vector<128x128xbf16>, vector<16x128xf32> -> vector<16x128xf32>
    %c0_3 = arith.constant 0 : index
    %c0_4 = arith.constant 0 : index
    %3 = vector.load %arg4[%c0_3, %c0_4] : memref<1x128xf32, #tpu.memory_space<vmem>>, vector<1x128xf32>
    %4 = vector.broadcast %3 : vector<1x128xf32> to vector<16x128xf32>
    %5 = arith.addf %2, %4 : vector<16x128xf32>
    %cst_5 = arith.constant 0.000000e+00 : f32
    %6 = vector.broadcast %cst_5 : f32 to vector<16x128xf32>
    %7 = arith.maximumf %5, %6 : vector<16x128xf32>
    %c0_6 = arith.constant 0 : index
    %c0_7 = arith.constant 0 : index
    %8 = vector.load %arg5[%c0_6, %c0_7] : memref<16x128xf32, #tpu.memory_space<vmem>>, vector<16x128xf32>
    tpu.vector_store %arg5[%c0_6, %c0_7], %7 {strides = array<i32>} : memref<16x128xf32, #tpu.memory_space<vmem>>, vector<16x128xf32>,
    return
  }
  func.func @transform_0(%arg0: i32, %arg1: i32) -> (i32, i32) {
    %c0_i32 = arith.constant 0 : i32
    %c0_i32_0 = arith.constant 0 : i32
    return %arg0, %c0_i32 : i32, i32
  }
  func.func @transform_1(%arg0: i32, %arg1: i32) -> (i32, i32) {
    %c0_i32 = arith.constant 0 : i32
    %c0_i32_0 = arith.constant 0 : i32
    return %c0_i32, %arg1 : i32, i32
  }
  func.func @transform_2(%arg0: i32, %arg1: i32) -> (i32, i32) {
    %c0_i32 = arith.constant 0 : i32
    %c0_i32_0 = arith.constant 0 : i32
    return %c0_i32, %arg1 : i32, i32
  }
  func.func @transform_3(%arg0: i32, %arg1: i32) -> (i32, i32) {
    %c0_i32 = arith.constant 0 : i32
    return %arg0, %arg1 : i32, i32
  }
}

</mosaic_0001>

<llo_original>
// kernel: tpu_custom_call.1
$region0: #{tpu_custom_call.1}
  #allocation0 [shape = 'u32[]', space=smem, size = 0x4, offset = 0x4, fixed_abs, tag = 'smem constant byte address 0x4 - core index']
  #allocation1 [shape = 'u32[144,128]{1,0:T(1,128)}', space=vmem, size = 0x12000, scoped, tag = 'internal scratch']
  %s0 = inlined_call_operand.hbm [shape: bf16[16,128], index: 0, kind: input, shape index: {}]
  %s1 = inlined_call_operand.hbm [shape: bf16[128,128], index: 1, kind: input, shape index: {}]
  %s2 = inlined_call_operand.vmem [shape: f32[1,128], index: 2, kind: input, shape index: {}]
  %s3 = inlined_call_operand.hbm [shape: f32[16,128], index: 3, kind: output, shape index: {}]
  %s4 = sld [smem:[#allocation0]]
  $region30: #{tpu_custom_call.1} parent=0
    _
  %s6 = ssub.s32 1, %s4
  %s7 = scalar_select 0, %s6, %s4
  $region1: #{tpu_custom_call.1} parent=0
    #allocation2 [shape = 'u8[4096]{0}', space=vmem, size = 0x1000, scoped, tag = 'input window, operand 0, single buffered']
    #allocation3 [shape = 's32[1]{0}', space=sflag, size = 0x4, scoped, tag = 'scoped memory for tpu_custom_call.1']
    #allocation4 [shape = 's32[1]{0}', space=sflag, size = 0x4, scoped, tag = 'scoped memory for tpu_custom_call.1']
    #allocation5 [shape = 'u8[32768]{0}', space=vmem, size = 0x8000, scoped, tag = 'input window, operand 1, single buffered']
    #allocation6 [shape = 's32[1]{0}', space=sflag, size = 0x4, scoped, tag = 'scoped memory for tpu_custom_call.1']
    #allocation7 [shape = 'u8[8192]{0}', space=vmem, size = 0x2000, scoped, tag = 'output window, operand 0, single buffered']
    %8 = vsyncpa [#allocation3], 0
    %9 = vsyncpa [#allocation6], 0
    %10 = vsyncpa [#allocation4], 0
    // Predicated region
    $region2: #{tpu_custom_call.1} parent=1 // pred_check
      _
    $region3: #{tpu_custom_call.1} parent=1 // pred_check_branch
      %12 = sbr.rel (0) target = $region5
    $region4: #{tpu_custom_call.1} parent=1 // pred_region
      %s14 = ssub.s32 128, 128
      %15 = vsyncadd [#allocation3], %s14
      %s16 = sshll.u32 [#allocation2], 4
      %s17 = int_to_ptr.vmem [resolvable:$true] %s16
      %22 = dma.hbm_to_vmem [thread:$0]  %s0, 128, %s17, [#allocation3], 64, 64, 4
    $region5: #{tpu_custom_call.1} parent=1 // pred_fallthru
      _
    // Predicated region
    $region6: #{tpu_custom_call.1} parent=1 // pred_check
      _
    $region7: #{tpu_custom_call.1} parent=1 // pred_check_branch
      %24 = sbr.rel (0) target = $region9
    $region8: #{tpu_custom_call.1} parent=1 // pred_region
      %s26 = ssub.s32 1024, 1024
      %27 = vsyncadd [#allocation6], %s26
      %s28 = sshll.u32 [#allocation5], 4
      %s29 = int_to_ptr.vmem [resolvable:$true] %s28
      %34 = dma.hbm_to_vmem [thread:$0]  %s1, 1024, %s29, [#allocation6], 64, 64, 4
    $region9: #{tpu_custom_call.1} parent=1 // pred_fallthru
      _
    // Predicated region
    $region10: #{tpu_custom_call.1} parent=1 // pred_check
      _
    $region11: #{tpu_custom_call.1} parent=1 // pred_check_branch
      %36 = sbr.rel (0) target = $region13
    $region12: #{tpu_custom_call.1} parent=1 // pred_region
      _
    $region13: #{tpu_custom_call.1} parent=1 // pred_fallthru
      _
    // Predicated region
    $region14: #{tpu_custom_call.1} parent=1 // pred_check
      _
    $region15: #{tpu_custom_call.1} parent=1 // pred_check_branch
      %38 = sbr.rel (0) target = $region17
    $region16: #{tpu_custom_call.1} parent=1 // pred_region
      %39 = dma.done [#allocation3], 128
    $region17: #{tpu_custom_call.1} parent=1 // pred_fallthru
      _
    // Predicated region
    $region18: #{tpu_custom_call.1} parent=1 // pred_check
      _
    $region19: #{tpu_custom_call.1} parent=1 // pred_check_branch
      %41 = sbr.rel (0) target = $region21
    $region20: #{tpu_custom_call.1} parent=1 // pred_region
      %42 = dma.done [#allocation6], 1024
    $region21: #{tpu_custom_call.1} parent=1 // pred_fallthru
      _
    %v44 = vld [vmem:[#allocation2] sm:$0xf]
    %v45 = vld [vmem:[#allocation2 + $0x4] sm:$0xf]
    %v46 = vld [vmem:[#allocation5] sm:$0xf]
    %v47 = vld [vmem:[#allocation5 + $0x4] sm:$0xf]
    %v48 = vld [vmem:[#allocation5 + $0x8] sm:$0xf]
    %v49 = vld [vmem:[#allocation5 + $0xc] sm:$0xf]
    %v50 = vld [vmem:[#allocation5 + $0x10] sm:$0xf]
    %v51 = vld [vmem:[#allocation5 + $0x14] sm:$0xf]
    %v52 = vld [vmem:[#allocation5 + $0x18] sm:$0xf]
    %v53 = vld [vmem:[#allocation5 + $0x1c] sm:$0xf]
    %v54 = vld [vmem:[#allocation5 + $0x20] sm:$0xf]
    %v55 = vld [vmem:[#allocation5 + $0x24] sm:$0xf]
    %v56 = vld [vmem:[#allocation5 + $0x28] sm:$0xf]
    %v57 = vld [vmem:[#allocation5 + $0x2c] sm:$0xf]
    %v58 = vld [vmem:[#allocation5 + $0x30] sm:$0xf]
    %v59 = vld [vmem:[#allocation5 + $0x34] sm:$0xf]
    %v60 = vld [vmem:[#allocation5 + $0x38] sm:$0xf]
    %v61 = vld [vmem:[#allocation5 + $0x3c] sm:$0xf]
    %v62 = vld [vmem:[%s2] sm:$0x1]
    %v64 = vlaneseq
    %v65 = vshrl.u32 %v64, 7
    %v66 = vsub.s32 0, %v65
    %v67 = vrot.slane %v62, %v66
    %v71 = vunpack.c.l.b16 %v44
    %v72 = vunpack.c.l.b16 %v45
    %v73 = vpack.c.b16 %v72, %v71
    %v91 = vunpack.c.l.b16 %v46
    %v92 = vunpack.c.l.b16 %v47
    %v93 = vunpack.c.l.b16 %v48
    %v94 = vunpack.c.l.b16 %v49
    %v95 = vunpack.c.l.b16 %v50
    %v96 = vunpack.c.l.b16 %v51
    %v97 = vunpack.c.l.b16 %v52
    %v98 = vunpack.c.l.b16 %v53
    %v99 = vunpack.c.l.b16 %v54
    %v100 = vunpack.c.l.b16 %v55
    %v101 = vunpack.c.l.b16 %v56
    %v102 = vunpack.c.l.b16 %v57
    %v103 = vunpack.c.l.b16 %v58
    %v104 = vunpack.c.l.b16 %v59
    %v105 = vunpack.c.l.b16 %v60
    %v106 = vunpack.c.l.b16 %v61
    %v107 = vpack.c.b16 %v92, %v91
    %v108 = vpack.c.b16 %v94, %v93
    %v109 = vpack.c.b16 %v96, %v95
    %v110 = vpack.c.b16 %v98, %v97
    %v111 = vpack.c.b16 %v100, %v99
    %v112 = vpack.c.b16 %v102, %v101
    %v113 = vpack.c.b16 %v104, %v103
    %v114 = vpack.c.b16 %v106, %v105
    %123 = vmatprep.subr.bf16.mxu0 0
    %124 = vmatpush1.bf16.msra.mxu0 %v107
    %125 = vmatprep.subr.bf16.mxu0 0
    %126 = vmatpush1.bf16.msra.mxu0 %v108
    %127 = vmatprep.subr.bf16.mxu0 0
    %128 = vmatpush1.bf16.msra.mxu0 %v109
    %129 = vmatprep.subr.bf16.mxu0 0
    %130 = vmatpush1.bf16.msra.mxu0 %v110
    %131 = vmatprep.subr.bf16.mxu0 0
    %132 = vmatpush1.bf16.msra.mxu0 %v111
    %133 = vmatprep.subr.bf16.mxu0 0
    %134 = vmatpush1.bf16.msra.mxu0 %v112
    %135 = vmatprep.subr.bf16.mxu0 0
    %136 = vmatpush1.bf16.msra.mxu0 %v113
    %137 = vmatprep.subr.bf16.mxu0 0
    %138 = vmatpush1.bf16.msra.mxu0 %v114
    %139 = vmatprep.subr.bf16.mxu0 0
    %140 = vmatpush1.bf16.msra.mxu0 0
    %141 = vmatprep.subr.bf16.mxu0 0
    %142 = vmatpush1.bf16.msra.mxu0 0
    %143 = vmatprep.subr.bf16.mxu0 0
    %144 = vmatpush1.bf16.msra.mxu0 0
    %145 = vmatprep.subr.bf16.mxu0 0
    %146 = vmatpush1.bf16.msra.mxu0 0
    %147 = vmatprep.subr.bf16.mxu0 0
    %148 = vmatpush1.bf16.msra.mxu0 0
    %149 = vmatprep.subr.bf16.mxu0 0
    %150 = vmatpush1.bf16.msra.mxu0 0
    %151 = vmatprep.subr.bf16.mxu0 0
    %152 = vmatpush1.bf16.msra.mxu0 0
    %153 = vmatprep.subr.bf16.mxu0 0
    %154 = vmatpush1.bf16.msra.mxu0 0
    %155 = vmatprep.mubr.bf16.mxu0 0
    %156 = vmatmul.mubr.bf16.gmra.mrb[0].mxu0 %v73
    %v157 = vpop.f32.mrb[0].mxu0
    %v158 = vadd.f32 %v67, %v157
    %v159 = vpop.f32.mrb[0].mxu0
    %v160 = vpop.f32.mrb[0].mxu0
    %v161 = vadd.f32 %v67, %v160
    %v162 = vpop.f32.mrb[0].mxu0
    %163 = vdwg.mxu0
    %v164 = vmax.f32 %v158, 0.0
    %v165 = vmax.f32 %v161, 0.0
    %166 = vst [vmem:[#allocation7] sm:$0xff] %v164
    %167 = vst [vmem:[#allocation7 + $0x8] sm:$0xff] %v165
    // Predicated region
    $region22: #{tpu_custom_call.1} parent=1 // pred_check
      _
    $region23: #{tpu_custom_call.1} parent=1 // pred_check_branch
      %169 = sbr.rel (0) target = $region25
    $region24: #{tpu_custom_call.1} parent=1 // pred_region
      %s171 = ssub.s32 256, 256
      %172 = vsyncadd [#allocation4], %s171
      %s173 = sshll.u32 [#allocation7], 4
      %s174 = int_to_ptr.vmem [resolvable:$true] %s173
      %179 = dma.vmem_to_hbm [thread:$0]  %s174, 256, %s3, [#allocation4], 128, 128, 8
    $region25: #{tpu_custom_call.1} parent=1 // pred_fallthru
      _
    // Predicated region
    $region26: #{tpu_custom_call.1} parent=1 // pred_check
      _
    $region27: #{tpu_custom_call.1} parent=1 // pred_check_branch
      %181 = sbr.rel (0) target = $region29
    $region28: #{tpu_custom_call.1} parent=1 // pred_region
      %182 = dma.done [#allocation4], 256
    $region29: #{tpu_custom_call.1} parent=1 // pred_fallthru
      _
    %183 = vsyncpa [#allocation3], 1
    %184 = vsyncpa [#allocation6], 1
    %185 = vsyncpa [#allocation4], 1

</llo_original>
